<compile_context>
chip_gen: v7x
topology: tpu7x:2x2x1
jax: 0.10.0
libtpu: 0.0.40
codegen_flags: <defaults>
</compile_context>

<pallas_src>
import jax
import jax.numpy as jnp
from jax.experimental import pallas as pl
from jax.experimental.pallas import tpu as pltpu

_LANE = 128
_SUBLANE_PACK = {4: 8, 2: 16, 1: 32}   # itemsize -> sublane packing factor
_MIN_PALLAS_ELEMENTS = 1 << 20         # below this, XLA's fused mul-add wins (launch cost / fusion)


# --------------------------------------------------------------------------------------
# Kernels
# --------------------------------------------------------------------------------------

def _sum_scale_kernel(x_ref, t1_ref, t2_ref, o_ref):
    # forward(x) = mod1(x) + mod2(x) = tensor1*x + tensor2*x, computed as (t1 + t2) * x.
    # (One FP reassociation vs. the literal reference expression; 2 VALU ops per vreg.)
    o_ref[...] = (t1_ref[...] + t2_ref[...]) * x_ref[...]


def _scale_kernel(x_ref, w_ref, o_ref):
    # Precombined-weight path: w = tensor1 + tensor2 hoisted out of the per-call hot path.
    o_ref[...] = w_ref[...] * x_ref[...]


# --------------------------------------------------------------------------------------
# Tiling policy
# --------------------------------------------------------------------------------------

def _chip_policy():
    """Per-generation (per-operand tile byte target, vmem_limit_bytes)."""
    cap = None
    try:
        info = pltpu.get_tpu_info()
        for attr in ("vmem_capacity_bytes", "vmem_size_bytes", "vmem_bytes"):
            v = getattr(info, attr, None)
            if v:
                cap = int(v)
                break
    except Exception:
        cap = None
    if cap is not None and cap >= (96 << 20):
        # v5e / v6e: 128 MiB physical. 4 MiB tiles (fewer ~0.35us grid steps); raise the
        # scoped limit (v5e defaults to 16 MiB) so 4 operands x 2 buffers x 4 MiB compiles.
        return 4 << 20, 64 << 20
    # v7x (64 MiB physical / 32 MiB scoped default) or unknown: stay conservative so
    # 4 operands x 2 buffers x 2 MiB = 16 MiB leaves headroom for compiler scratch.
    return 2 << 20, 40 << 20


def _choose_slab(n, itemsize, target_tile_bytes):
    """Pick (rows, width, tile_rows) for a lane-dense 2-D view of a length-n flat array.

    Returns None if n is not aligned to (sublane_pack, 128); callers fall back to plain JAX.
    """
    pack = _SUBLANE_PACK.get(itemsize, 8)
    if n == 0 or n % (pack * _LANE) != 0:
        return None

    # Widest lane dimension (multiple of 128) that keeps rows an exact multiple of the
    # sublane packing -> unmasked lane-dense stores, large contiguous DMA descriptors.
    width = _LANE
    for cand in (4096, 2048, 1024, 512, 256):
        if n % (cand * pack) == 0:
            width = cand
            break
    rows = n // width

    # Row tile near the per-operand byte budget, rounded to the sublane pack. No
    # divisibility requirement: the grid uses cdiv and the ragged last block is masked,
    # so awkward row counts keep the ~MiB operating point instead of collapsing to 4 KiB.
    target_rows = max(pack, (target_tile_bytes // (width * itemsize)) // pack * pack)
    tile_rows = max(pack, (min(rows, target_rows) // pack) * pack)

    # Megacore: if the whole slab would fit one tile but spans >1 sublane pack of rows,
    # split it so dimension_semantics=("parallel",) can shard >=2 tiles across v7x's two
    # TensorCores (no-op on single-TC v5e/v6e).
    if tile_rows >= rows and rows > pack:
        tile_rows = pl.cdiv(rows // pack, 2) * pack

    return rows, width, tile_rows


# --------------------------------------------------------------------------------------
# Launch helper + public wrappers
# --------------------------------------------------------------------------------------

def _pallas_elementwise(kernel, x, operands, *, flops_per_elem, min_pallas_elements, fallback):
    """Run `kernel(x, *operands) -> out` over a lane-dense 2-D slab, or fall back to XLA."""
    same = all(o.shape == x.shape and o.dtype == x.dtype for o in operands)
    if not same:
        # Broadcasting / mixed dtype: let XLA handle promotion + fusion (still roofline-bound).
        return fallback()

    n = x.size
    itemsize = jnp.dtype(x.dtype).itemsize
    target_tile_bytes, vmem_limit = _chip_policy()
    slab = _choose_slab(n, itemsize, target_tile_bytes)
    if slab is None or n < min_pallas_elements:
        # Tiny or non-(pack,128)-aligned inputs: custom-call overhead dwarfs the ~us of
        # HBM traffic and blocks XLA fusion; also avoids pad/slice HBM round trips.
        return fallback()

    rows, width, tile_rows = slab
    grid = pl.cdiv(rows, tile_rows)
    spec = pl.BlockSpec((tile_rows, width), lambda i: (i, 0))
    num_inputs = len(operands) + 1
    num_operands = num_inputs + 1  # + output

    out2d = pl.pallas_call(
        kernel,
        out_shape=jax.ShapeDtypeStruct((rows, width), x.dtype),
        grid=(grid,),
        in_specs=[spec] * num_inputs,
        out_specs=spec,
        compiler_params=pltpu.CompilerParams(
            dimension_semantics=("parallel",),   # shard row tiles across v7x's 2 TensorCores
            vmem_limit_bytes=vmem_limit,
        ),
        cost_estimate=pl.CostEstimate(
            flops=flops_per_elem * n,
            transcendentals=0,
            bytes_accessed=num_operands * n * itemsize,
        ),
    )(x.reshape(rows, width), *(o.reshape(rows, width) for o in operands))
    return out2d.reshape(x.shape)


def mod_with_multiple_submods_forward(x, tensor1, tensor2, *,
                                      min_pallas_elements=_MIN_PALLAS_ELEMENTS):
    """Stateless ModWithMultipleSubmods.forward with ModWithTensor submodules:
    tensor1 * x + tensor2 * x  (computed in-kernel as (tensor1 + tensor2) * x)."""
    return _pallas_elementwise(
        _sum_scale_kernel, x, (tensor1, tensor2),
        flops_per_elem=2,
        min_pallas_elements=min_pallas_elements,
        fallback=lambda: tensor1 * x + tensor2 * x,
    )


def make_mod_with_multiple_submods(tensor1, tensor2, *,
                                   min_pallas_elements=_MIN_PALLAS_ELEMENTS):
    """Factory mirroring ModWithMultipleSubmods(ModWithTensor(t1), ModWithTensor(t2)).

    The submodule parameters are static across calls, so combine them ONCE here
    (w = tensor1 + tensor2). Each forward then moves 3N bytes (x, w, out) instead of 4N.
    """
    w = tensor1 + tensor2  # hoisted out of the per-call hot path

    def forward(x):
        return _pallas_elementwise(
            _scale_kernel, x, (w,),
            flops_per_elem=1,
            min_pallas_elements=min_pallas_elements,
            fallback=lambda: w * x,
        )

    return forward


# --------------------------------------------------------------------------------------
# Demo / self-test
# --------------------------------------------------------------------------------------

if __name__ == "__main__":
    key = jax.random.PRNGKey(0)
    k_x, k_t1, k_t2 = jax.random.split(key, 3)

    # Small NCHW-shaped input; the two "stored tensors" are the ModWithTensor parameters.
    x = jax.random.normal(k_x, (2, 4, 16, 16), dtype=jnp.float32)
    tensor1 = jax.random.normal(k_t1, (2, 4, 16, 16), dtype=jnp.float32)
    tensor2 = jax.random.normal(k_t2, (2, 4, 16, 16), dtype=jnp.float32)

    ref = tensor1 * x + tensor2 * x

    # Stateless 3-input Pallas path ((t1 + t2) * x). min_pallas_elements=0 forces the
    # Pallas path for this deliberately tiny demo shape; the production default bypasses
    # Pallas for small inputs and lets XLA fuse the multiply-add.
    out = mod_with_multiple_submods_forward(x, tensor1, tensor2, min_pallas_elements=0)
    out = jax.block_until_ready(out)
    assert out.shape == x.shape and out.dtype == x.dtype
    assert jnp.allclose(out, ref, atol=1e-5, rtol=1e-5)

    # Precombined-weight path (w = t1 + t2 hoisted once; 3N bytes of HBM traffic per call).
    fwd = make_mod_with_multiple_submods(tensor1, tensor2, min_pallas_elements=0)
    out2 = jax.block_until_ready(fwd(x))
    assert out2.shape == x.shape and out2.dtype == x.dtype
    assert jnp.allclose(out2, ref, atol=1e-5, rtol=1e-5)

    # Non-aligned shape routes through the fused-XLA fallback.
    x_odd = jax.random.normal(k_x, (3, 5, 7), dtype=jnp.float32)
    t_odd = jax.random.normal(k_t1, (3, 5, 7), dtype=jnp.float32)
    out3 = jax.block_until_ready(mod_with_multiple_submods_forward(x_odd, t_odd, t_odd))
    assert jnp.allclose(out3, t_odd * x_odd + t_odd * x_odd, atol=1e-5, rtol=1e-5)

    print("KERNEL_OK")
</pallas_src>

<mosaic_0001>
module attributes {stable_mosaic.version = 11 : i64} {
  func.func @_sum_scale_kernel(%arg0: i32, %arg1: memref<8x256xf32, #tpu.memory_space<vmem>>, %arg2: memref<8x256xf32, #tpu.memory_space<vmem>>, %arg3: memref<8x256xf32, #tpu.memory_space<vmem>>, %arg4: memref<8x256xf32, #tpu.memory_space<vmem>>) attributes {dimension_semantics = [#tpu.dimension_semantics<parallel>], iteration_bounds = array<i64: 1>, scalar_prefetch = 0 : i64, scratch_operands = 0 : i64, tpu.core_type = #tpu.core_type<tc>, window_params = [{transform_indices = @transform_0, window_bounds = array<i64: 8, 256>}, {transform_indices = @transform_1, window_bounds = array<i64: 8, 256>}, {transform_indices = @transform_2, window_bounds = array<i64: 8, 256>}, {transform_indices = @transform_3, window_bounds = array<i64: 8, 256>}]} {
    %c0 = arith.constant 0 : index
    %c0_0 = arith.constant 0 : index
    %0 = vector.load %arg2[%c0, %c0_0] : memref<8x256xf32, #tpu.memory_space<vmem>>, vector<8x256xf32>
    %c0_1 = arith.constant 0 : index
    %c0_2 = arith.constant 0 : index
    %1 = vector.load %arg3[%c0_1, %c0_2] : memref<8x256xf32, #tpu.memory_space<vmem>>, vector<8x256xf32>
    %2 = arith.addf %0, %1 : vector<8x256xf32>
    %c0_3 = arith.constant 0 : index
    %c0_4 = arith.constant 0 : index
    %3 = vector.load %arg1[%c0_3, %c0_4] : memref<8x256xf32, #tpu.memory_space<vmem>>, vector<8x256xf32>
    %4 = arith.mulf %2, %3 : vector<8x256xf32>
    %c0_5 = arith.constant 0 : index
    %c0_6 = arith.constant 0 : index
    %5 = vector.load %arg4[%c0_5, %c0_6] : memref<8x256xf32, #tpu.memory_space<vmem>>, vector<8x256xf32>
    tpu.vector_store %arg4[%c0_5, %c0_6], %4 {strides = array<i32>} : memref<8x256xf32, #tpu.memory_space<vmem>>, vector<8x256xf32>,
    return
  }
  func.func @transform_0(%arg0: i32) -> (i32, i32) {
    %c0_i32 = arith.constant 0 : i32
    %c0_i32_0 = arith.constant 0 : i32
    return %arg0, %c0_i32 : i32, i32
  }
  func.func @transform_1(%arg0: i32) -> (i32, i32) {
    %c0_i32 = arith.constant 0 : i32
    %c0_i32_0 = arith.constant 0 : i32
    return %arg0, %c0_i32 : i32, i32
  }
  func.func @transform_2(%arg0: i32) -> (i32, i32) {
    %c0_i32 = arith.constant 0 : i32
    %c0_i32_0 = arith.constant 0 : i32
    return %arg0, %c0_i32 : i32, i32
  }
  func.func @transform_3(%arg0: i32) -> (i32, i32) {
    %c0_i32 = arith.constant 0 : i32
    %c0_i32_0 = arith.constant 0 : i32
    return %arg0, %c0_i32 : i32, i32
  }
}

</mosaic_0001>

<llo_original>
// kernel: tpu_custom_call.1
$region0: #{tpu_custom_call.1}
  #allocation0 [shape = 'u32[]', space=smem, size = 0x4, offset = 0x4, fixed_abs, tag = 'smem constant byte address 0x4 - core index']
  #allocation1 [shape = 'u32[144,128]{1,0:T(1,128)}', space=vmem, size = 0x12000, scoped, tag = 'internal scratch']
  %s0 = inlined_call_operand.hbm [shape: f32[8,256], index: 0, kind: input, shape index: {}]
  %s1 = inlined_call_operand.hbm [shape: f32[8,256], index: 1, kind: input, shape index: {}]
  %s2 = inlined_call_operand.hbm [shape: f32[8,256], index: 2, kind: input, shape index: {}]
  %s3 = inlined_call_operand.hbm [shape: f32[8,256], index: 3, kind: output, shape index: {}]
  %s4 = sld [smem:[#allocation0]]
  $region34: #{tpu_custom_call.1} parent=0
    _
  %s6 = ssub.s32 1, %s4
  %s7 = scalar_select 0, %s6, %s4
  $region1: #{tpu_custom_call.1} parent=0
    #allocation2 [shape = 'u8[8192]{0}', space=vmem, size = 0x2000, scoped, tag = 'input window, operand 0, single buffered']
    #allocation3 [shape = 's32[1]{0}', space=sflag, size = 0x4, scoped, tag = 'scoped memory for tpu_custom_call.1']
    #allocation4 [shape = 's32[1]{0}', space=sflag, size = 0x4, scoped, tag = 'scoped memory for tpu_custom_call.1']
    #allocation5 [shape = 'u8[8192]{0}', space=vmem, size = 0x2000, scoped, tag = 'input window, operand 1, single buffered']
    #allocation6 [shape = 's32[1]{0}', space=sflag, size = 0x4, scoped, tag = 'scoped memory for tpu_custom_call.1']
    #allocation7 [shape = 'u8[8192]{0}', space=vmem, size = 0x2000, scoped, tag = 'input window, operand 2, single buffered']
    #allocation8 [shape = 'u8[8192]{0}', space=vmem, size = 0x2000, scoped, tag = 'output window, operand 0, single buffered']
    %8 = vsyncpa [#allocation3], 0
    %9 = vsyncpa [#allocation6], 0
    %10 = vsyncpa [#allocation4], 0
    // Predicated region
    $region2: #{tpu_custom_call.1} parent=1 // pred_check
      _
    $region3: #{tpu_custom_call.1} parent=1 // pred_check_branch
      %12 = sbr.rel (0) target = $region5
    $region4: #{tpu_custom_call.1} parent=1 // pred_region
      %s14 = ssub.s32 256, 256
      %15 = vsyncadd [#allocation3], %s14
      %s17 = sshll.u32 [#allocation2], 4
      %s18 = int_to_ptr.vmem [resolvable:$true] %s17
      %20 = dma.hbm_to_vmem [thread:$0]  %s0, 256, %s18, [#allocation3]
    $region5: #{tpu_custom_call.1} parent=1 // pred_fallthru
      _
    // Predicated region
    $region6: #{tpu_custom_call.1} parent=1 // pred_check
      _
    $region7: #{tpu_custom_call.1} parent=1 // pred_check_branch
      %22 = sbr.rel (0) target = $region9
    $region8: #{tpu_custom_call.1} parent=1 // pred_region
      %s24 = ssub.s32 256, 256
      %25 = vsyncadd [#allocation6], %s24
      %s27 = sshll.u32 [#allocation5], 4
      %s28 = int_to_ptr.vmem [resolvable:$true] %s27
      %30 = dma.hbm_to_vmem [thread:$0]  %s1, 256, %s28, [#allocation6]
    $region9: #{tpu_custom_call.1} parent=1 // pred_fallthru
      _
    // Predicated region
    $region10: #{tpu_custom_call.1} parent=1 // pred_check
      _
    $region11: #{tpu_custom_call.1} parent=1 // pred_check_branch
      %32 = sbr.rel (0) target = $region13
    $region12: #{tpu_custom_call.1} parent=1 // pred_region
      %s34 = ssub.s32 256, 256
      %35 = vsyncadd [#allocation6], %s34
      %s37 = sshll.u32 [#allocation7], 4
      %s38 = int_to_ptr.vmem [resolvable:$true] %s37
      %40 = dma.hbm_to_vmem [thread:$0]  %s2, 256, %s38, [#allocation6]
    $region13: #{tpu_custom_call.1} parent=1 // pred_fallthru
      _
    // Predicated region
    $region14: #{tpu_custom_call.1} parent=1 // pred_check
      _
    $region15: #{tpu_custom_call.1} parent=1 // pred_check_branch
      %42 = sbr.rel (0) target = $region17
    $region16: #{tpu_custom_call.1} parent=1 // pred_region
      %43 = dma.done [#allocation3], 256
    $region17: #{tpu_custom_call.1} parent=1 // pred_fallthru
      _
    // Predicated region
    $region18: #{tpu_custom_call.1} parent=1 // pred_check
      _
    $region19: #{tpu_custom_call.1} parent=1 // pred_check_branch
      %45 = sbr.rel (0) target = $region21
    $region20: #{tpu_custom_call.1} parent=1 // pred_region
      %46 = dma.done [#allocation6], 256
    $region21: #{tpu_custom_call.1} parent=1 // pred_fallthru
      _
    // Predicated region
    $region22: #{tpu_custom_call.1} parent=1 // pred_check
      _
    $region23: #{tpu_custom_call.1} parent=1 // pred_check_branch
      %48 = sbr.rel (0) target = $region25
    $region24: #{tpu_custom_call.1} parent=1 // pred_region
      %49 = dma.done [#allocation6], 256
    $region25: #{tpu_custom_call.1} parent=1 // pred_fallthru
      _
    %v50 = vld [vmem:[#allocation5] sm:$0xff]
    %v51 = vld [vmem:[#allocation5 + $0x8] sm:$0xff]
    %v52 = vld [vmem:[#allocation7] sm:$0xff]
    %v53 = vld [vmem:[#allocation7 + $0x8] sm:$0xff]
    %v54 = vadd.f32 %v50, %v52
    %v55 = vadd.f32 %v51, %v53
    %v56 = vld [vmem:[#allocation2] sm:$0xff]
    %v57 = vld [vmem:[#allocation2 + $0x8] sm:$0xff]
    %v58 = vmul.f32 %v54, %v56
    %v59 = vmul.f32 %v55, %v57
    %60 = vst [vmem:[#allocation8] sm:$0xff] %v58
    %61 = vst [vmem:[#allocation8 + $0x8] sm:$0xff] %v59
    // Predicated region
    $region26: #{tpu_custom_call.1} parent=1 // pred_check
      _
    $region27: #{tpu_custom_call.1} parent=1 // pred_check_branch
      %63 = sbr.rel (0) target = $region29
    $region28: #{tpu_custom_call.1} parent=1 // pred_region
      %s65 = ssub.s32 256, 256
      %66 = vsyncadd [#allocation4], %s65
      %s68 = sshll.u32 [#allocation8], 4
      %s69 = int_to_ptr.vmem [resolvable:$true] %s68
      %71 = dma.vmem_to_hbm [thread:$0]  %s69, 256, %s3, [#allocation4]
    $region29: #{tpu_custom_call.1} parent=1 // pred_fallthru
      _
    // Predicated region
    $region30: #{tpu_custom_call.1} parent=1 // pred_check
      _
    $region31: #{tpu_custom_call.1} parent=1 // pred_check_branch
      %73 = sbr.rel (0) target = $region33
    $region32: #{tpu_custom_call.1} parent=1 // pred_region
      %74 = dma.done [#allocation4], 256
    $region33: #{tpu_custom_call.1} parent=1 // pred_fallthru
      _
    %75 = vsyncpa [#allocation3], 1
    %76 = vsyncpa [#allocation6], 1
    %77 = vsyncpa [#allocation4], 1

</llo_original>
